<compile_context>
chip_gen: v7x
topology: tpu7x:2x2x1
jax: 0.10.0
libtpu: 0.0.40
codegen_flags: <defaults>
</compile_context>

<pallas_src>
import functools

import jax
import jax.numpy as jnp
from jax.experimental import pallas as pl
from jax.experimental.pallas import tpu as pltpu


def _layer_norm_kernel(x_ref, gamma_ref, beta_ref, o_ref, *, eps, feat):
    x = x_ref[...].astype(jnp.float32)                          # (rb, F)
    mean = jnp.mean(x, axis=-1, keepdims=True)                  # (rb, 1)
    xc = x - mean
    # torch.std default: unbiased (N-1) estimator.
    var = jnp.sum(xc * xc, axis=-1, keepdims=True) * (1.0 / (feat - 1))
    std = jnp.sqrt(var)
    # Per-row inverse (exact) instead of a full (rows, F) divide.
    inv = pl.reciprocal(std + eps, approx=False)                # (rb, 1)
    y = (xc * inv) * gamma_ref[...].astype(jnp.float32) \
        + beta_ref[...].astype(jnp.float32)
    o_ref[...] = y.astype(o_ref.dtype)


def _choose_row_block(rows, feat):
    """Pick a row block from a conservative total-VMEM budget (~12 MiB)."""
    vmem_budget = 12 * 1024 * 1024          # safe under v5e's 16 MiB default
    rb = vmem_budget // (6 * feat * 4)      # ~6 live fp32 copies of the tile
    rb = max(8, (rb // 8) * 8)
    # v7x megacore: keep at least 2 grid steps on large tensors so the
    # "parallel" row axis can be sharded across both TensorCores.
    if rows >= 2048:
        half = ((pl.cdiv(rows, 2) + 7) // 8) * 8
        rb = min(rb, max(8, half))
    return rb


def layer_norm(x, gamma, beta, *, eps=1e-6, row_block=None):
    """LayerNorm over the last axis of x.  gamma/beta: shape (features,)."""
    feat = x.shape[-1]
    assert gamma.shape == (feat,) and beta.shape == (feat,)
    orig_shape = x.shape
    x2 = x.reshape(-1, feat)
    rows = x2.shape[0]

    if row_block is None:
        row_block = _choose_row_block(rows, feat)
    if rows <= row_block:
        # Single grid step; a full-dim block also handles rows % 8 != 0.
        row_block = rows
    else:
        assert row_block % 8 == 0, "row_block must be a multiple of 8"

    grid = pl.cdiv(rows, row_block)
    # TODO(synk): if F not a multiple of 128 is hit at scale, pad gamma/beta/x
    # feature dim once to avoid 25%-lane masked stores.

    out = pl.pallas_call(
        functools.partial(_layer_norm_kernel, eps=eps, feat=feat),
        out_shape=jax.ShapeDtypeStruct((rows, feat), x.dtype),
        grid_spec=pltpu.PrefetchScalarGridSpec(
            num_scalar_prefetch=0,
            grid=(grid,),
            in_specs=[
                pl.BlockSpec((row_block, feat), lambda i: (i, 0)),   # x rows
                pl.BlockSpec((1, feat), lambda i: (0, 0)),           # gamma
                pl.BlockSpec((1, feat), lambda i: (0, 0)),           # beta
            ],
            out_specs=pl.BlockSpec((row_block, feat), lambda i: (i, 0)),
        ),
        compiler_params=pltpu.CompilerParams(
            dimension_semantics=("parallel",)),   # rows fully independent
    )(x2, gamma.reshape(1, feat), beta.reshape(1, feat))

    return out.reshape(orig_shape)


# ----------------------------------------------------------------------------
# Pure-JAX reference (mirrors the PyTorch module exactly).
# ----------------------------------------------------------------------------
def _ref_layer_norm(x, gamma, beta, eps=1e-6):
    xf = x.astype(jnp.float32)
    mean = jnp.mean(xf, axis=-1, keepdims=True)
    std = jnp.std(xf, axis=-1, keepdims=True, ddof=1)   # unbiased == torch.std
    return (gamma * (xf - mean) / (std + eps) + beta).astype(x.dtype)


if __name__ == "__main__":
    key = jax.random.PRNGKey(0)
    kx, kg, kb, kx2 = jax.random.split(key, 4)

    # Main case: (seq=8, batch=4, features=256) — lane-dense feature dim.
    x = jax.random.normal(kx, (8, 4, 256), jnp.float32)
    gamma = 1.0 + 0.1 * jax.random.normal(kg, (256,), jnp.float32)
    beta = 0.1 * jax.random.normal(kb, (256,), jnp.float32)

    out = jax.block_until_ready(layer_norm(x, gamma, beta))
    ref = _ref_layer_norm(x, gamma, beta)
    assert out.shape == x.shape, out.shape
    assert jnp.allclose(out, ref, atol=1e-5, rtol=1e-5), \
        float(jnp.max(jnp.abs(out - ref)))

    # Tiled path with a partial trailing block (32 rows, blocks of 24 -> grid
    # of 2, last block only 8 valid rows) — no pad / slice round trip.
    out_tiled = jax.block_until_ready(layer_norm(x, gamma, beta, row_block=24))
    assert jnp.allclose(out_tiled, ref, atol=1e-5, rtol=1e-5), \
        float(jnp.max(jnp.abs(out_tiled - ref)))

    # Small ragged case: rows (15) not a multiple of 8, F=32 not a multiple of
    # 128 — single full-dim block; module default init (gamma=1, beta=0).
    x_s = jax.random.normal(kx2, (5, 3, 32), jnp.float32)
    g_s = jnp.ones((32,), jnp.float32)
    b_s = jnp.zeros((32,), jnp.float32)
    out_s = jax.block_until_ready(layer_norm(x_s, g_s, b_s))
    ref_s = _ref_layer_norm(x_s, g_s, b_s)
    assert jnp.allclose(out_s, ref_s, atol=1e-5, rtol=1e-5), \
        float(jnp.max(jnp.abs(out_s - ref_s)))

    # bf16 input/output (fp32 compute inside the kernel).
    x_b = x.astype(jnp.bfloat16)
    out_b = jax.block_until_ready(layer_norm(x_b, gamma, beta))
    ref_b = _ref_layer_norm(x_b, gamma, beta)
    assert out_b.dtype == jnp.bfloat16
    assert jnp.allclose(out_b.astype(jnp.float32), ref_b.astype(jnp.float32),
                        atol=2e-2, rtol=2e-2)

    print("KERNEL_OK")
</pallas_src>

<mosaic_0001>
module attributes {stable_mosaic.version = 11 : i64} {
  func.func @_layer_norm_kernel(%arg0: i32, %arg1: memref<32x256xf32, #tpu.memory_space<vmem>>, %arg2: memref<1x256xf32, #tpu.memory_space<vmem>>, %arg3: memref<1x256xf32, #tpu.memory_space<vmem>>, %arg4: memref<32x256xf32, #tpu.memory_space<vmem>>) attributes {dimension_semantics = [#tpu.dimension_semantics<parallel>], iteration_bounds = array<i64: 1>, scalar_prefetch = 0 : i64, scratch_operands = 0 : i64, tpu.core_type = #tpu.core_type<tc>, window_params = [{transform_indices = @transform_0, window_bounds = array<i64: 32, 256>}, {pipeline_mode = #tpu.pipeline_mode<synchronous>, transform_indices = @transform_1, window_bounds = array<i64: 1, 256>}, {pipeline_mode = #tpu.pipeline_mode<synchronous>, transform_indices = @transform_2, window_bounds = array<i64: 1, 256>}, {transform_indices = @transform_3, window_bounds = array<i64: 32, 256>}]} {
    %c0 = arith.constant 0 : index
    %c0_0 = arith.constant 0 : index
    %0 = vector.load %arg1[%c0, %c0_0] : memref<32x256xf32, #tpu.memory_space<vmem>>, vector<32x256xf32>
    %cst = arith.constant dense<0.000000e+00> : vector<32xf32>
    %1 = vector.multi_reduction <add>, %0, %cst [1] : vector<32x256xf32> to vector<32xf32>
    %2 = vector.shape_cast %1 : vector<32xf32> to vector<32x1xf32>
    %cst_1 = arith.constant 2.560000e+02 : f32
    %3 = vector.broadcast %cst_1 : f32 to vector<32x1xf32>
    %4 = arith.divf %2, %3 : vector<32x1xf32>
    %5 = vector.broadcast %4 : vector<32x1xf32> to vector<32x256xf32>
    %6 = arith.subf %0, %5 : vector<32x256xf32>
    %7 = arith.mulf %6, %6 : vector<32x256xf32>
    %cst_2 = arith.constant dense<0.000000e+00> : vector<32xf32>
    %8 = vector.multi_reduction <add>, %7, %cst_2 [1] : vector<32x256xf32> to vector<32xf32>
    %9 = vector.shape_cast %8 : vector<32xf32> to vector<32x1xf32>
    %cst_3 = arith.constant 0.00392156886 : f32
    %10 = vector.broadcast %cst_3 : f32 to vector<32x1xf32>
    %11 = arith.mulf %9, %10 : vector<32x1xf32>
    %12 = math.sqrt %11 : vector<32x1xf32>
    %cst_4 = arith.constant 9.99999997E-7 : f32
    %13 = vector.broadcast %cst_4 : f32 to vector<32x1xf32>
    %14 = arith.addf %12, %13 : vector<32x1xf32>
    %15 = tpu.reciprocal %14 : vector<32x1xf32> -> vector<32x1xf32>
    %16 = vector.broadcast %15 : vector<32x1xf32> to vector<32x256xf32>
    %17 = arith.mulf %6, %16 : vector<32x256xf32>
    %c0_5 = arith.constant 0 : index
    %c0_6 = arith.constant 0 : index
    %18 = vector.load %arg2[%c0_5, %c0_6] : memref<1x256xf32, #tpu.memory_space<vmem>>, vector<1x256xf32>
    %19 = vector.broadcast %18 : vector<1x256xf32> to vector<32x256xf32>
    %20 = arith.mulf %17, %19 : vector<32x256xf32>
    %c0_7 = arith.constant 0 : index
    %c0_8 = arith.constant 0 : index
    %21 = vector.load %arg3[%c0_7, %c0_8] : memref<1x256xf32, #tpu.memory_space<vmem>>, vector<1x256xf32>
    %22 = vector.broadcast %21 : vector<1x256xf32> to vector<32x256xf32>
    %23 = arith.addf %20, %22 : vector<32x256xf32>
    %c0_9 = arith.constant 0 : index
    %c0_10 = arith.constant 0 : index
    %24 = vector.load %arg4[%c0_9, %c0_10] : memref<32x256xf32, #tpu.memory_space<vmem>>, vector<32x256xf32>
    tpu.vector_store %arg4[%c0_9, %c0_10], %23 {strides = array<i32>} : memref<32x256xf32, #tpu.memory_space<vmem>>, vector<32x256xf32>,
    return
  }
  func.func @transform_0(%arg0: i32) -> (i32, i32) {
    %c0_i32 = arith.constant 0 : i32
    %c0_i32_0 = arith.constant 0 : i32
    return %arg0, %c0_i32 : i32, i32
  }
  func.func @transform_1(%arg0: i32) -> (i32, i32) {
    %c0_i32 = arith.constant 0 : i32
    %c0_i32_0 = arith.constant 0 : i32
    %c0_i32_1 = arith.constant 0 : i32
    return %c0_i32, %c0_i32_0 : i32, i32
  }
  func.func @transform_2(%arg0: i32) -> (i32, i32) {
    %c0_i32 = arith.constant 0 : i32
    %c0_i32_0 = arith.constant 0 : i32
    %c0_i32_1 = arith.constant 0 : i32
    return %c0_i32, %c0_i32_0 : i32, i32
  }
  func.func @transform_3(%arg0: i32) -> (i32, i32) {
    %c0_i32 = arith.constant 0 : i32
    %c0_i32_0 = arith.constant 0 : i32
    return %arg0, %c0_i32 : i32, i32
  }
}

</mosaic_0001>

<llo_original>
// kernel: tpu_custom_call.1
$region0: #{tpu_custom_call.1}
  #allocation0 [shape = 'u32[]', space=smem, size = 0x4, offset = 0x4, fixed_abs, tag = 'smem constant byte address 0x4 - core index']
  #allocation1 [shape = 'u32[144,128]{1,0:T(1,128)}', space=vmem, size = 0x12000, scoped, tag = 'internal scratch']
  %s0 = inlined_call_operand.hbm [shape: f32[32,256], index: 0, kind: input, shape index: {}]
  %s1 = inlined_call_operand.vmem [shape: f32[1,256], index: 1, kind: input, shape index: {}]
  %s2 = inlined_call_operand.vmem [shape: f32[1,256], index: 2, kind: input, shape index: {}]
  %s3 = inlined_call_operand.hbm [shape: f32[32,256], index: 3, kind: output, shape index: {}]
  %s4 = sld [smem:[#allocation0]]
  $region26: #{tpu_custom_call.1} parent=0
    _
  %s6 = ssub.s32 1, %s4
  %s7 = scalar_select 0, %s6, %s4
  $region1: #{tpu_custom_call.1} parent=0
    #allocation2 [shape = 'u8[32768]{0}', space=vmem, size = 0x8000, scoped, tag = 'input window, operand 0, single buffered']
    #allocation3 [shape = 's32[1]{0}', space=sflag, size = 0x4, scoped, tag = 'scoped memory for tpu_custom_call.1']
    #allocation4 [shape = 's32[1]{0}', space=sflag, size = 0x4, scoped, tag = 'scoped memory for tpu_custom_call.1']
    #allocation5 [shape = 'u8[32768]{0}', space=vmem, size = 0x8000, scoped, tag = 'output window, operand 0, single buffered']
    %8 = vsyncpa [#allocation3], 0
    %9 = vsyncpa [#allocation4], 0
    // Predicated region
    $region2: #{tpu_custom_call.1} parent=1 // pred_check
      _
    $region3: #{tpu_custom_call.1} parent=1 // pred_check_branch
      %11 = sbr.rel (0) target = $region5
    $region4: #{tpu_custom_call.1} parent=1 // pred_region
      %s13 = ssub.s32 1024, 1024
      %14 = vsyncadd [#allocation3], %s13
      %s15 = sshll.u32 [#allocation2], 4
      %s16 = int_to_ptr.vmem [resolvable:$true] %s15
      %21 = dma.hbm_to_vmem [thread:$0]  %s0, 1024, %s16, [#allocation3], 256, 256, 16
    $region5: #{tpu_custom_call.1} parent=1 // pred_fallthru
      _
    // Predicated region
    $region6: #{tpu_custom_call.1} parent=1 // pred_check
      _
    $region7: #{tpu_custom_call.1} parent=1 // pred_check_branch
      %23 = sbr.rel (0) target = $region9
    $region8: #{tpu_custom_call.1} parent=1 // pred_region
      _
    $region9: #{tpu_custom_call.1} parent=1 // pred_fallthru
      _
    // Predicated region
    $region10: #{tpu_custom_call.1} parent=1 // pred_check
      _
    $region11: #{tpu_custom_call.1} parent=1 // pred_check_branch
      %25 = sbr.rel (0) target = $region13
    $region12: #{tpu_custom_call.1} parent=1 // pred_region
      _
    $region13: #{tpu_custom_call.1} parent=1 // pred_fallthru
      _
    // Predicated region
    $region14: #{tpu_custom_call.1} parent=1 // pred_check
      _
    $region15: #{tpu_custom_call.1} parent=1 // pred_check_branch
      %27 = sbr.rel (0) target = $region17
    $region16: #{tpu_custom_call.1} parent=1 // pred_region
      %28 = dma.done [#allocation3], 1024
    $region17: #{tpu_custom_call.1} parent=1 // pred_fallthru
      _
    %v29 = vld [vmem:[#allocation2] sm:$0xff]
    %v30 = vld [vmem:[#allocation2 + $0x8] sm:$0xff]
    %v31 = vld [vmem:[#allocation2 + $0x10] sm:$0xff]
    %v32 = vld [vmem:[#allocation2 + $0x18] sm:$0xff]
    %v33 = vld [vmem:[#allocation2 + $0x20] sm:$0xff]
    %v34 = vld [vmem:[#allocation2 + $0x28] sm:$0xff]
    %v35 = vld [vmem:[#allocation2 + $0x30] sm:$0xff]
    %v36 = vld [vmem:[#allocation2 + $0x38] sm:$0xff]
    %v37 = vadd.f32 %v29, %v30
    %38 = vadd.xlane.f32.xlu0 %v37
    %v39 = vpop.xlane.xlu0 %38
    %v40 = vadd.f32 %v31, %v32
    %41 = vadd.xlane.f32.xlu0 %v40
    %v42 = vpop.xlane.xlu0 %41
    %v43 = vadd.f32 %v33, %v34
    %44 = vadd.xlane.f32.xlu0 %v43
    %v45 = vpop.xlane.xlu0 %44
    %v46 = vadd.f32 %v35, %v36
    %47 = vadd.xlane.f32.xlu0 %v46
    %v48 = vpop.xlane.xlu0 %47
    %v49 = vrcp.pop 256.0
    %v50 = vmul.f32 %v39, %v49
    %v51 = vmul.f32 %v42, %v49
    %v52 = vmul.f32 %v45, %v49
    %v53 = vmul.f32 %v48, %v49
    %v54 = vsub.f32 %v29, %v50
    %v55 = vsub.f32 %v30, %v50
    %v56 = vsub.f32 %v31, %v51
    %v57 = vsub.f32 %v32, %v51
    %v58 = vsub.f32 %v33, %v52
    %v59 = vsub.f32 %v34, %v52
    %v60 = vsub.f32 %v35, %v53
    %v61 = vsub.f32 %v36, %v53
    %v62 = vmul.f32 %v54, %v54
    %v63 = vmul.f32 %v55, %v55
    %v64 = vmul.f32 %v56, %v56
    %v65 = vmul.f32 %v57, %v57
    %v66 = vmul.f32 %v58, %v58
    %v67 = vmul.f32 %v59, %v59
    %v68 = vmul.f32 %v60, %v60
    %v69 = vmul.f32 %v61, %v61
    %v70 = vadd.f32 %v62, %v63
    %71 = vadd.xlane.f32.xlu0 %v70
    %v72 = vpop.xlane.xlu0 %71
    %v73 = vadd.f32 %v64, %v65
    %74 = vadd.xlane.f32.xlu0 %v73
    %v75 = vpop.xlane.xlu0 %74
    %v76 = vadd.f32 %v66, %v67
    %77 = vadd.xlane.f32.xlu0 %v76
    %v78 = vpop.xlane.xlu0 %77
    %v79 = vadd.f32 %v68, %v69
    %80 = vadd.xlane.f32.xlu0 %v79
    %v81 = vpop.xlane.xlu0 %80
    %v82 = vmul.f32 %v72, 0.003921569
    %v83 = vmul.f32 %v75, 0.003921569
    %v84 = vmul.f32 %v78, 0.003921569
    %v85 = vmul.f32 %v81, 0.003921569
    %v86 = vrsqrt.pop %v82
    %v87 = vmul.f32 %v82, %v86
    %vm88 = vcmp.eq.f32.partialorder %v82, inf
    %v89 = vsel %vm88, %v82, %v87
    %vm90 = vcmp.eq.f32.partialorder %v82, 0.0
    %v91 = vand.u32 %v82, 2147483648
    %v92 = vsel %vm90, %v91, %v89
    %v93 = vrsqrt.pop %v83
    %v94 = vmul.f32 %v83, %v93
    %vm95 = vcmp.eq.f32.partialorder %v83, inf
    %v96 = vsel %vm95, %v83, %v94
    %vm97 = vcmp.eq.f32.partialorder %v83, 0.0
    %v98 = vand.u32 %v83, 2147483648
    %v99 = vsel %vm97, %v98, %v96
    %v100 = vrsqrt.pop %v84
    %v101 = vmul.f32 %v84, %v100
    %vm102 = vcmp.eq.f32.partialorder %v84, inf
    %v103 = vsel %vm102, %v84, %v101
    %vm104 = vcmp.eq.f32.partialorder %v84, 0.0
    %v105 = vand.u32 %v84, 2147483648
    %v106 = vsel %vm104, %v105, %v103
    %v107 = vrsqrt.pop %v85
    %v108 = vmul.f32 %v85, %v107
    %vm109 = vcmp.eq.f32.partialorder %v85, inf
    %v110 = vsel %vm109, %v85, %v108
    %vm111 = vcmp.eq.f32.partialorder %v85, 0.0
    %v112 = vand.u32 %v85, 2147483648
    %v113 = vsel %vm111, %v112, %v110
    %v114 = vadd.f32 %v92, 1e-06
    %v115 = vadd.f32 %v99, 1e-06
    %v116 = vadd.f32 %v106, 1e-06
    %v117 = vadd.f32 %v113, 1e-06
    %v118 = vrcp.pop %v114
    %v119 = vrcp.pop %v115
    %v120 = vrcp.pop %v116
    %v121 = vrcp.pop %v117
    %v122 = vmul.f32 %v54, %v118
    %v123 = vmul.f32 %v55, %v118
    %v124 = vmul.f32 %v56, %v119
    %v125 = vmul.f32 %v57, %v119
    %v126 = vmul.f32 %v58, %v120
    %v127 = vmul.f32 %v59, %v120
    %v128 = vmul.f32 %v60, %v121
    %v129 = vmul.f32 %v61, %v121
    %v130 = vld [vmem:[%s1] sm:$0x3]
    %v132 = vlaneseq
    %v133 = vshrl.u32 %v132, 7
    %v134 = vsub.s32 0, %v133
    %v135 = vrot.slane %v130, %v134
    %v136 = vlaneseq
    %v137 = vshrl.u32 %v136, 7
    %v138 = vsub.s32 1, %v137
    %v139 = vrot.slane %v130, %v138
    %v142 = vmul.f32 %v122, %v135
    %v143 = vmul.f32 %v123, %v139
    %v144 = vmul.f32 %v124, %v135
    %v145 = vmul.f32 %v125, %v139
    %v146 = vmul.f32 %v126, %v135
    %v147 = vmul.f32 %v127, %v139
    %v148 = vmul.f32 %v128, %v135
    %v149 = vmul.f32 %v129, %v139
    %v150 = vld [vmem:[%s2] sm:$0x3]
    %v152 = vlaneseq
    %v153 = vshrl.u32 %v152, 7
    %v154 = vsub.s32 0, %v153
    %v155 = vrot.slane %v150, %v154
    %v156 = vlaneseq
    %v157 = vshrl.u32 %v156, 7
    %v158 = vsub.s32 1, %v157
    %v159 = vrot.slane %v150, %v158
    %v162 = vadd.f32 %v142, %v155
    %v163 = vadd.f32 %v143, %v159
    %v164 = vadd.f32 %v144, %v155
    %v165 = vadd.f32 %v145, %v159
    %v166 = vadd.f32 %v146, %v155
    %v167 = vadd.f32 %v147, %v159
    %v168 = vadd.f32 %v148, %v155
    %v169 = vadd.f32 %v149, %v159
    %170 = vst [vmem:[#allocation5] sm:$0xff] %v162
    %171 = vst [vmem:[#allocation5 + $0x8] sm:$0xff] %v163
    %172 = vst [vmem:[#allocation5 + $0x10] sm:$0xff] %v164
    %173 = vst [vmem:[#allocation5 + $0x18] sm:$0xff] %v165
    %174 = vst [vmem:[#allocation5 + $0x20] sm:$0xff] %v166
    %175 = vst [vmem:[#allocation5 + $0x28] sm:$0xff] %v167
    %176 = vst [vmem:[#allocation5 + $0x30] sm:$0xff] %v168
    %177 = vst [vmem:[#allocation5 + $0x38] sm:$0xff] %v169
    // Predicated region
    $region18: #{tpu_custom_call.1} parent=1 // pred_check
      _
    $region19: #{tpu_custom_call.1} parent=1 // pred_check_branch
      %179 = sbr.rel (0) target = $region21
    $region20: #{tpu_custom_call.1} parent=1 // pred_region
      %s181 = ssub.s32 1024, 1024
      %182 = vsyncadd [#allocation4], %s181
      %s183 = sshll.u32 [#allocation5], 4
      %s184 = int_to_ptr.vmem [resolvable:$true] %s183
      %189 = dma.vmem_to_hbm [thread:$0]  %s184, 1024, %s3, [#allocation4], 256, 256, 16
    $region21: #{tpu_custom_call.1} parent=1 // pred_fallthru
      _
    // Predicated region
    $region22: #{tpu_custom_call.1} parent=1 // pred_check
      _
    $region23: #{tpu_custom_call.1} parent=1 // pred_check_branch
      %191 = sbr.rel (0) target = $region25
    $region24: #{tpu_custom_call.1} parent=1 // pred_region
      %192 = dma.done [#allocation4], 1024
    $region25: #{tpu_custom_call.1} parent=1 // pred_fallthru
      _
    %193 = vsyncpa [#allocation3], 1
    %194 = vsyncpa [#allocation4], 1

</llo_original>
